<compile_context>
chip_gen: v7x
topology: tpu7x:2x2x1
jax: 0.10.0
libtpu: 0.0.40
codegen_flags: <defaults>
</compile_context>

<pallas_src>
import functools

import jax
import jax.numpy as jnp
from jax.experimental import pallas as pl
from jax.experimental.pallas import tpu as pltpu


def _round_up(x, m):
    return ((x + m - 1) // m) * m


_SQRT_HALF = 0.7071067811865476
_SQRT_2_OVER_PI = 0.7978845608028654


def _gelu_exact(x):
    # matches torch.nn.functional.gelu(..., approximate='none'); one erf per elem
    return 0.5 * x * (1.0 + jax.lax.erf(x * _SQRT_HALF))


def _gelu_tanh(x):
    # torch gelu approximate='tanh'; jnp.tanh uses the (otherwise idle) EUP slot
    return 0.5 * x * (1.0 + jnp.tanh(_SQRT_2_OVER_PI * (x + 0.044715 * x * x * x)))


def _mlp_kernel(s_ref, g_ref, w1_ref, b1_ref, w2_ref, b2_ref, w3_ref, b3_ref,
                out_ref, *, n, approx_gelu):
    gelu = _gelu_tanh if approx_gelu else _gelu_exact

    s = s_ref[...]                                   # (TB, n)
    g = g_ref[...]                                   # (TB, n)

    # fc1: cat(state, goal) @ w1 == state @ w1[:n] + goal @ w1[n:2n]
    h1 = (jnp.dot(s, w1_ref[0:n, :], preferred_element_type=jnp.float32)
          + jnp.dot(g, w1_ref[n:2 * n, :], preferred_element_type=jnp.float32)
          + b1_ref[...])
    h1 = gelu(h1)                                    # f32 elementwise (v5e-safe)

    h2 = jnp.dot(h1.astype(w2_ref.dtype), w2_ref[...],
                 preferred_element_type=jnp.float32) + b2_ref[...]
    h2 = gelu(h2)                                    # (TB, 128) f32

    out = jnp.dot(h2.astype(w3_ref.dtype), w3_ref[...],
                  preferred_element_type=jnp.float32) + b3_ref[...]
    out_ref[...] = out.astype(out_ref.dtype)         # (TB, n)


def bitflipping_dqn_forward(state, goal, params, *, block_b=1024,
                            use_bf16=False, approx_gelu=False,
                            core_parallel=False):
    """state, goal: (B, n). params: dict of (in, out)-layout weights/biases."""
    B, n = state.shape
    hidden = params["w2"].shape[0]                   # 128

    state = state.astype(jnp.float32)
    goal = goal.astype(jnp.float32)
    w1, w2, w3 = params["w1"], params["w2"], params["w3"]
    b1 = params["b1"].reshape(1, hidden).astype(jnp.float32)
    b2 = params["b2"].reshape(1, hidden).astype(jnp.float32)
    b3 = params["b3"].reshape(1, n).astype(jnp.float32)

    if use_bf16:
        # bf16 MXU operands only; bias-add/GELU stay f32 inside the kernel.
        # TODO(synk): hoist the one-time weight casts into a param-prep step if
        # this wrapper is ever called outside jit.
        state, goal = state.astype(jnp.bfloat16), goal.astype(jnp.bfloat16)
        w1, w2, w3 = (w.astype(jnp.bfloat16) for w in (w1, w2, w3))
        sublane = 16                                 # bf16 packs 16 sublanes/vreg
    else:
        w1, w2, w3 = (w.astype(jnp.float32) for w in (w1, w2, w3))
        sublane = 8

    # Batch tile: sublane multiple, default up to 1024 rows; no padding of B.
    tb = min(block_b, _round_up(B, sublane))
    tb = max(sublane, (tb // sublane) * sublane)
    grid = (pl.cdiv(B, tb),)                         # partial tail block is masked

    const = lambda i: (0, 0)                         # weights stay VMEM-resident
    batch_sem = pltpu.CORE_PARALLEL if core_parallel else "parallel"
    kernel = functools.partial(_mlp_kernel, n=n, approx_gelu=approx_gelu)

    return pl.pallas_call(
        kernel,
        out_shape=jax.ShapeDtypeStruct((B, n), jnp.float32),
        grid=grid,
        in_specs=[
            pl.BlockSpec((tb, n), lambda i: (i, 0)),         # state block
            pl.BlockSpec((tb, n), lambda i: (i, 0)),         # goal block
            pl.BlockSpec((2 * n, hidden), const),            # w1
            pl.BlockSpec((1, hidden), const),                # b1
            pl.BlockSpec((hidden, hidden), const),           # w2
            pl.BlockSpec((1, hidden), const),                # b2
            pl.BlockSpec((hidden, n), const),                # w3 (n-wide output)
            pl.BlockSpec((1, n), const),                     # b3
        ],
        out_specs=pl.BlockSpec((tb, n), lambda i: (i, 0)),
        compiler_params=pltpu.CompilerParams(
            dimension_semantics=(batch_sem,)),
    )(state, goal, w1, b1, w2, b2, w3, b3)


def init_params(key, n, hidden=128):
    """Deterministic synthetic init (PyTorch-Linear-style uniform bounds)."""
    ks = jax.random.split(key, 6)

    def lin(kw, kb, fan_in, fan_out):
        bound = 1.0 / jnp.sqrt(fan_in)
        w = jax.random.uniform(kw, (fan_in, fan_out), jnp.float32, -bound, bound)
        b = jax.random.uniform(kb, (1, fan_out), jnp.float32, -bound, bound)
        return w, b

    w1, b1 = lin(ks[0], ks[1], 2 * n, hidden)
    w2, b2 = lin(ks[2], ks[3], hidden, hidden)
    w3, b3 = lin(ks[4], ks[5], hidden, n)
    return {"w1": w1, "b1": b1, "w2": w2, "b2": b2, "w3": w3, "b3": b3}


def _reference_forward(state, goal, params):
    x = jnp.concatenate([state, goal], axis=1)
    x = _gelu_exact(x @ params["w1"] + params["b1"])
    x = _gelu_exact(x @ params["w2"] + params["b2"])
    return x @ params["w3"] + params["b3"]


if __name__ == "__main__":
    n = 8        # bit-sequence length
    key = jax.random.PRNGKey(0)
    k_state, k_goal, k_param, k_state2, k_goal2 = jax.random.split(key, 5)
    params = init_params(k_param, n)

    # Case 1: tiny batch -> single partial block (no wrapper-side pad/concat).
    B = 4
    state = jax.random.bernoulli(k_state, 0.5, (B, n)).astype(jnp.float32)
    goal = jax.random.bernoulli(k_goal, 0.5, (B, n)).astype(jnp.float32)
    q = jax.block_until_ready(bitflipping_dqn_forward(state, goal, params))
    ref = _reference_forward(state, goal, params)
    assert q.shape == (B, n)
    assert jnp.allclose(q, ref, atol=1e-5, rtol=1e-5)

    # Case 2: block_b=8 -> 3 grid steps with a partial (4-row) tail block.
    B2 = 20
    state2 = jax.random.bernoulli(k_state2, 0.5, (B2, n)).astype(jnp.float32)
    goal2 = jax.random.bernoulli(k_goal2, 0.5, (B2, n)).astype(jnp.float32)
    q2 = jax.block_until_ready(
        bitflipping_dqn_forward(state2, goal2, params, block_b=8))
    ref2 = _reference_forward(state2, goal2, params)
    assert q2.shape == (B2, n)
    assert jnp.allclose(q2, ref2, atol=1e-5, rtol=1e-5)

    # Case 3: flag-gated tanh-approximate GELU (EUP path), looser tolerance.
    q3 = jax.block_until_ready(
        bitflipping_dqn_forward(state2, goal2, params, approx_gelu=True))
    assert q3.shape == (B2, n)
    assert jnp.allclose(q3, ref2, atol=5e-2, rtol=0.0)

    print("KERNEL_OK")
</pallas_src>

<mosaic_0001>
module attributes {stable_mosaic.version = 11 : i64} {
  func.func @_mlp_kernel(%arg0: i32, %arg1: memref<8x8xf32, #tpu.memory_space<vmem>>, %arg2: memref<8x8xf32, #tpu.memory_space<vmem>>, %arg3: memref<16x128xf32, #tpu.memory_space<vmem>>, %arg4: memref<1x128xf32, #tpu.memory_space<vmem>>, %arg5: memref<128x128xf32, #tpu.memory_space<vmem>>, %arg6: memref<1x128xf32, #tpu.memory_space<vmem>>, %arg7: memref<128x8xf32, #tpu.memory_space<vmem>>, %arg8: memref<1x8xf32, #tpu.memory_space<vmem>>, %arg9: memref<8x8xf32, #tpu.memory_space<vmem>>) attributes {dimension_semantics = [#tpu.dimension_semantics<parallel>], iteration_bounds = array<i64: 1>, scalar_prefetch = 0 : i64, scratch_operands = 0 : i64, tpu.core_type = #tpu.core_type<tc>, window_params = [{transform_indices = @transform_0, window_bounds = array<i64: 8, 8>}, {transform_indices = @transform_1, window_bounds = array<i64: 8, 8>}, {pipeline_mode = #tpu.pipeline_mode<synchronous>, transform_indices = @transform_2, window_bounds = array<i64: 16, 128>}, {pipeline_mode = #tpu.pipeline_mode<synchronous>, transform_indices = @transform_3, window_bounds = array<i64: 1, 128>}, {pipeline_mode = #tpu.pipeline_mode<synchronous>, transform_indices = @transform_4, window_bounds = array<i64: 128, 128>}, {pipeline_mode = #tpu.pipeline_mode<synchronous>, transform_indices = @transform_5, window_bounds = array<i64: 1, 128>}, {pipeline_mode = #tpu.pipeline_mode<synchronous>, transform_indices = @transform_6, window_bounds = array<i64: 128, 8>}, {pipeline_mode = #tpu.pipeline_mode<synchronous>, transform_indices = @transform_7, window_bounds = array<i64: 1, 8>}, {transform_indices = @transform_8, window_bounds = array<i64: 8, 8>}]} {
    %c0 = arith.constant 0 : index
    %c0_0 = arith.constant 0 : index
    %0 = vector.load %arg1[%c0, %c0_0] : memref<8x8xf32, #tpu.memory_space<vmem>>, vector<8x8xf32>
    %c0_1 = arith.constant 0 : index
    %c0_2 = arith.constant 0 : index
    %1 = vector.load %arg2[%c0_1, %c0_2] : memref<8x8xf32, #tpu.memory_space<vmem>>, vector<8x8xf32>
    %c0_3 = arith.constant 0 : index
    %c0_4 = arith.constant 0 : index
    %2 = vector.load %arg3[%c0_3, %c0_4] : memref<16x128xf32, #tpu.memory_space<vmem>>, vector<8x128xf32>
    %cst = arith.constant dense<0.000000e+00> : vector<8x128xf32>
    %3 = tpu.matmul %0, %2, %cst {dimension_numbers = #tpu.dot_dimension_numbers<[1], [0], [0], [1], [0, 0, 1, 1], [], []>} : vector<8x8xf32>, vector<8x128xf32>, vector<8x128xf32> -> vector<8x128xf32>
    %c8 = arith.constant 8 : index
    %c0_5 = arith.constant 0 : index
    %4 = vector.load %arg3[%c8, %c0_5] : memref<16x128xf32, #tpu.memory_space<vmem>>, vector<8x128xf32>
    %cst_6 = arith.constant dense<0.000000e+00> : vector<8x128xf32>
    %5 = tpu.matmul %1, %4, %cst_6 {dimension_numbers = #tpu.dot_dimension_numbers<[1], [0], [0], [1], [0, 0, 1, 1], [], []>} : vector<8x8xf32>, vector<8x128xf32>, vector<8x128xf32> -> vector<8x128xf32>
    %6 = arith.addf %3, %5 : vector<8x128xf32>
    %c0_7 = arith.constant 0 : index
    %c0_8 = arith.constant 0 : index
    %7 = vector.load %arg4[%c0_7, %c0_8] : memref<1x128xf32, #tpu.memory_space<vmem>>, vector<1x128xf32>
    %8 = vector.broadcast %7 : vector<1x128xf32> to vector<8x128xf32>
    %9 = arith.addf %6, %8 : vector<8x128xf32>
    %cst_9 = arith.constant 5.000000e-01 : f32
    %10 = vector.broadcast %cst_9 : f32 to vector<8x128xf32>
    %11 = arith.mulf %10, %9 : vector<8x128xf32>
    %cst_10 = arith.constant 0.707106769 : f32
    %12 = vector.broadcast %cst_10 : f32 to vector<8x128xf32>
    %13 = arith.mulf %9, %12 : vector<8x128xf32>
    %14 = math.erf %13 : vector<8x128xf32>
    %cst_11 = arith.constant 1.000000e+00 : f32
    %15 = vector.broadcast %cst_11 : f32 to vector<8x128xf32>
    %16 = arith.addf %15, %14 : vector<8x128xf32>
    %17 = arith.mulf %11, %16 : vector<8x128xf32>
    %c0_12 = arith.constant 0 : index
    %c0_13 = arith.constant 0 : index
    %18 = vector.load %arg5[%c0_12, %c0_13] : memref<128x128xf32, #tpu.memory_space<vmem>>, vector<128x128xf32>
    %cst_14 = arith.constant dense<0.000000e+00> : vector<8x128xf32>
    %19 = tpu.matmul %17, %18, %cst_14 {dimension_numbers = #tpu.dot_dimension_numbers<[1], [0], [0], [1], [0, 0, 1, 1], [], []>} : vector<8x128xf32>, vector<128x128xf32>, vector<8x128xf32> -> vector<8x128xf32>
    %c0_15 = arith.constant 0 : index
    %c0_16 = arith.constant 0 : index
    %20 = vector.load %arg6[%c0_15, %c0_16] : memref<1x128xf32, #tpu.memory_space<vmem>>, vector<1x128xf32>
    %21 = vector.broadcast %20 : vector<1x128xf32> to vector<8x128xf32>
    %22 = arith.addf %19, %21 : vector<8x128xf32>
    %cst_17 = arith.constant 5.000000e-01 : f32
    %23 = vector.broadcast %cst_17 : f32 to vector<8x128xf32>
    %24 = arith.mulf %23, %22 : vector<8x128xf32>
    %cst_18 = arith.constant 0.707106769 : f32
    %25 = vector.broadcast %cst_18 : f32 to vector<8x128xf32>
    %26 = arith.mulf %22, %25 : vector<8x128xf32>
    %27 = math.erf %26 : vector<8x128xf32>
    %cst_19 = arith.constant 1.000000e+00 : f32
    %28 = vector.broadcast %cst_19 : f32 to vector<8x128xf32>
    %29 = arith.addf %28, %27 : vector<8x128xf32>
    %30 = arith.mulf %24, %29 : vector<8x128xf32>
    %c0_20 = arith.constant 0 : index
    %c0_21 = arith.constant 0 : index
    %31 = vector.load %arg7[%c0_20, %c0_21] : memref<128x8xf32, #tpu.memory_space<vmem>>, vector<128x8xf32>
    %cst_22 = arith.constant dense<0.000000e+00> : vector<8x8xf32>
    %32 = tpu.matmul %30, %31, %cst_22 {dimension_numbers = #tpu.dot_dimension_numbers<[1], [0], [0], [1], [0, 0, 1, 1], [], []>} : vector<8x128xf32>, vector<128x8xf32>, vector<8x8xf32> -> vector<8x8xf32>
    %c0_23 = arith.constant 0 : index
    %c0_24 = arith.constant 0 : index
    %33 = vector.load %arg8[%c0_23, %c0_24] : memref<1x8xf32, #tpu.memory_space<vmem>>, vector<1x8xf32>
    %34 = vector.broadcast %33 : vector<1x8xf32> to vector<8x8xf32>
    %35 = arith.addf %32, %34 : vector<8x8xf32>
    %c0_25 = arith.constant 0 : index
    %c0_26 = arith.constant 0 : index
    %36 = vector.load %arg9[%c0_25, %c0_26] : memref<8x8xf32, #tpu.memory_space<vmem>>, vector<8x8xf32>
    tpu.vector_store %arg9[%c0_25, %c0_26], %35 {strides = array<i32>} : memref<8x8xf32, #tpu.memory_space<vmem>>, vector<8x8xf32>,
    return
  }
  func.func @transform_0(%arg0: i32) -> (i32, i32) {
    %c0_i32 = arith.constant 0 : i32
    %c0_i32_0 = arith.constant 0 : i32
    return %arg0, %c0_i32 : i32, i32
  }
  func.func @transform_1(%arg0: i32) -> (i32, i32) {
    %c0_i32 = arith.constant 0 : i32
    %c0_i32_0 = arith.constant 0 : i32
    return %arg0, %c0_i32 : i32, i32
  }
  func.func @transform_2(%arg0: i32) -> (i32, i32) {
    %c0_i32 = arith.constant 0 : i32
    %c0_i32_0 = arith.constant 0 : i32
    %c0_i32_1 = arith.constant 0 : i32
    return %c0_i32, %c0_i32_0 : i32, i32
  }
  func.func @transform_3(%arg0: i32) -> (i32, i32) {
    %c0_i32 = arith.constant 0 : i32
    %c0_i32_0 = arith.constant 0 : i32
    %c0_i32_1 = arith.constant 0 : i32
    return %c0_i32, %c0_i32_0 : i32, i32
  }
  func.func @transform_4(%arg0: i32) -> (i32, i32) {
    %c0_i32 = arith.constant 0 : i32
    %c0_i32_0 = arith.constant 0 : i32
    %c0_i32_1 = arith.constant 0 : i32
    return %c0_i32, %c0_i32_0 : i32, i32
  }
  func.func @transform_5(%arg0: i32) -> (i32, i32) {
    %c0_i32 = arith.constant 0 : i32
    %c0_i32_0 = arith.constant 0 : i32
    %c0_i32_1 = arith.constant 0 : i32
    return %c0_i32, %c0_i32_0 : i32, i32
  }
  func.func @transform_6(%arg0: i32) -> (i32, i32) {
    %c0_i32 = arith.constant 0 : i32
    %c0_i32_0 = arith.constant 0 : i32
    %c0_i32_1 = arith.constant 0 : i32
    return %c0_i32, %c0_i32_0 : i32, i32
  }
  func.func @transform_7(%arg0: i32) -> (i32, i32) {
    %c0_i32 = arith.constant 0 : i32
    %c0_i32_0 = arith.constant 0 : i32
    %c0_i32_1 = arith.constant 0 : i32
    return %c0_i32, %c0_i32_0 : i32, i32
  }
  func.func @transform_8(%arg0: i32) -> (i32, i32) {
    %c0_i32 = arith.constant 0 : i32
    %c0_i32_0 = arith.constant 0 : i32
    return %arg0, %c0_i32 : i32, i32
  }
}

</mosaic_0001>

<llo_original>
// kernel: tpu_custom_call.1
$region0: #{tpu_custom_call.1}
  #allocation0 [shape = 'u32[]', space=smem, size = 0x4, offset = 0x4, fixed_abs, tag = 'smem constant byte address 0x4 - core index']
  #allocation1 [shape = 'u32[144,128]{1,0:T(1,128)}', space=vmem, size = 0x12000, scoped, tag = 'internal scratch']
  %s0 = inlined_call_operand.hbm [shape: f32[4,8], index: 0, kind: input, shape index: {}]
  %s1 = inlined_call_operand.hbm [shape: f32[4,8], index: 1, kind: input, shape index: {}]
  %s2 = inlined_call_operand.vmem [shape: f32[16,128], index: 2, kind: input, shape index: {}]
  %s3 = inlined_call_operand.vmem [shape: f32[1,128], index: 3, kind: input, shape index: {}]
  %s4 = inlined_call_operand.vmem [shape: f32[128,128], index: 4, kind: input, shape index: {}]
  %s5 = inlined_call_operand.vmem [shape: f32[1,128], index: 5, kind: input, shape index: {}]
  %s6 = inlined_call_operand.vmem [shape: f32[128,8], index: 6, kind: input, shape index: {}]
  %s7 = inlined_call_operand.vmem [shape: f32[1,8], index: 7, kind: input, shape index: {}]
  %s8 = inlined_call_operand.hbm [shape: f32[4,8], index: 8, kind: output, shape index: {}]
  %s9 = sld [smem:[#allocation0]]
  $region50: #{tpu_custom_call.1} parent=0
    _
  %s11 = ssub.s32 1, %s9
  %s12 = scalar_select 0, %s11, %s9
  $region1: #{tpu_custom_call.1} parent=0
    #allocation2 [shape = 'u8[4096]{0}', space=vmem, size = 0x1000, scoped, tag = 'input window, operand 0, single buffered']
    #allocation3 [shape = 's32[1]{0}', space=sflag, size = 0x4, scoped, tag = 'scoped memory for tpu_custom_call.1']
    #allocation4 [shape = 's32[1]{0}', space=sflag, size = 0x4, scoped, tag = 'scoped memory for tpu_custom_call.1']
    #allocation5 [shape = 'u8[4096]{0}', space=vmem, size = 0x1000, scoped, tag = 'input window, operand 1, single buffered']
    #allocation6 [shape = 's32[1]{0}', space=sflag, size = 0x4, scoped, tag = 'scoped memory for tpu_custom_call.1']
    #allocation7 [shape = 'u8[4096]{0}', space=vmem, size = 0x1000, scoped, tag = 'output window, operand 0, single buffered']
    %13 = vsyncpa [#allocation3], 0
    %14 = vsyncpa [#allocation6], 0
    %15 = vsyncpa [#allocation4], 0
    // Predicated region
    $region2: #{tpu_custom_call.1} parent=1 // pred_check
      _
    $region3: #{tpu_custom_call.1} parent=1 // pred_check_branch
      %17 = sbr.rel (0) target = $region5
    $region4: #{tpu_custom_call.1} parent=1 // pred_region
      %s19 = ssub.s32 128, 64
      %20 = vsyncadd [#allocation3], %s19
      %s21 = sshll.u32 [#allocation2], 4
      %s22 = int_to_ptr.vmem [resolvable:$true] %s21
      %27 = dma.hbm_to_vmem [thread:$0]  %s0, 64, %s22, [#allocation3], 64, 64, 4
    $region5: #{tpu_custom_call.1} parent=1 // pred_fallthru
      _
    // Predicated region
    $region6: #{tpu_custom_call.1} parent=1 // pred_check
      _
    $region7: #{tpu_custom_call.1} parent=1 // pred_check_branch
      %29 = sbr.rel (0) target = $region9
    $region8: #{tpu_custom_call.1} parent=1 // pred_region
      %s31 = ssub.s32 128, 64
      %32 = vsyncadd [#allocation6], %s31
      %s33 = sshll.u32 [#allocation5], 4
      %s34 = int_to_ptr.vmem [resolvable:$true] %s33
      %39 = dma.hbm_to_vmem [thread:$0]  %s1, 64, %s34, [#allocation6], 64, 64, 4
    $region9: #{tpu_custom_call.1} parent=1 // pred_fallthru
      _
    // Predicated region
    $region10: #{tpu_custom_call.1} parent=1 // pred_check
      _
    $region11: #{tpu_custom_call.1} parent=1 // pred_check_branch
      %41 = sbr.rel (0) target = $region13
    $region12: #{tpu_custom_call.1} parent=1 // pred_region
      _
    $region13: #{tpu_custom_call.1} parent=1 // pred_fallthru
      _
    // Predicated region
    $region14: #{tpu_custom_call.1} parent=1 // pred_check
      _
    $region15: #{tpu_custom_call.1} parent=1 // pred_check_branch
      %43 = sbr.rel (0) target = $region17
    $region16: #{tpu_custom_call.1} parent=1 // pred_region
      _
    $region17: #{tpu_custom_call.1} parent=1 // pred_fallthru
      _
    // Predicated region
    $region18: #{tpu_custom_call.1} parent=1 // pred_check
      _
    $region19: #{tpu_custom_call.1} parent=1 // pred_check_branch
      %45 = sbr.rel (0) target = $region21
    $region20: #{tpu_custom_call.1} parent=1 // pred_region
      _
    $region21: #{tpu_custom_call.1} parent=1 // pred_fallthru
      _
    // Predicated region
    $region22: #{tpu_custom_call.1} parent=1 // pred_check
      _
    $region23: #{tpu_custom_call.1} parent=1 // pred_check_branch
      %47 = sbr.rel (0) target = $region25
    $region24: #{tpu_custom_call.1} parent=1 // pred_region
      _
    $region25: #{tpu_custom_call.1} parent=1 // pred_fallthru
      _
    // Predicated region
    $region26: #{tpu_custom_call.1} parent=1 // pred_check
      _
    $region27: #{tpu_custom_call.1} parent=1 // pred_check_branch
      %49 = sbr.rel (0) target = $region29
    $region28: #{tpu_custom_call.1} parent=1 // pred_region
      _
    $region29: #{tpu_custom_call.1} parent=1 // pred_fallthru
      _
    // Predicated region
    $region30: #{tpu_custom_call.1} parent=1 // pred_check
      _
    $region31: #{tpu_custom_call.1} parent=1 // pred_check_branch
      %51 = sbr.rel (0) target = $region33
    $region32: #{tpu_custom_call.1} parent=1 // pred_region
      _
    $region33: #{tpu_custom_call.1} parent=1 // pred_fallthru
      _
    // Predicated region
    $region34: #{tpu_custom_call.1} parent=1 // pred_check
      _
    $region35: #{tpu_custom_call.1} parent=1 // pred_check_branch
      %53 = sbr.rel (0) target = $region37
    $region36: #{tpu_custom_call.1} parent=1 // pred_region
      %54 = dma.done [#allocation3], 128
    $region37: #{tpu_custom_call.1} parent=1 // pred_fallthru
      _
    // Predicated region
    $region38: #{tpu_custom_call.1} parent=1 // pred_check
      _
    $region39: #{tpu_custom_call.1} parent=1 // pred_check_branch
      %56 = sbr.rel (0) target = $region41
    $region40: #{tpu_custom_call.1} parent=1 // pred_region
      %57 = dma.done [#allocation6], 128
    $region41: #{tpu_custom_call.1} parent=1 // pred_fallthru
      _
    %v58 = vld [vmem:[#allocation2] sm:$0xff]
    %v59 = vld [vmem:[#allocation5] sm:$0xff]
    %v60 = vld [vmem:[%s2] sm:$0xff]
    %v61 = vld [vmem:[%s2 + $0x8] sm:$0xff]
    %vm62 = vcmask 64512
    %v64 = vsel %vm62, %v59, 0
    %66 = vmatprep.subr.mxu0 0.0
    %67 = vmatpush1.msra.mxu0 %v61
    %68 = vmatprep.subr.mxu0 0.0
    %69 = vmatpush1.msra.mxu0 0.0
    %70 = vmatprep.subr.mxu0 0.0
    %71 = vmatpush1.msra.mxu0 0.0
    %72 = vmatprep.subr.mxu0 0.0
    %73 = vmatpush1.msra.mxu0 0.0
    %74 = vmatprep.subr.mxu0 0.0
    %75 = vmatpush1.msra.mxu0 0.0
    %76 = vmatprep.subr.mxu0 0.0
    %77 = vmatpush1.msra.mxu0 0.0
    %78 = vmatprep.subr.mxu0 0.0
    %79 = vmatpush1.msra.mxu0 0.0
    %80 = vmatprep.subr.mxu0 0.0
    %81 = vmatpush1.msra.mxu0 0.0
    %82 = vmatprep.subr.mxu0 0.0
    %83 = vmatpush1.msra.mxu0 0.0
    %84 = vmatprep.subr.mxu0 0.0
    %85 = vmatpush1.msra.mxu0 0.0
    %86 = vmatprep.subr.mxu0 0.0
    %87 = vmatpush1.msra.mxu0 0.0
    %88 = vmatprep.subr.mxu0 0.0
    %89 = vmatpush1.msra.mxu0 0.0
    %90 = vmatprep.subr.mxu0 0.0
    %91 = vmatpush1.msra.mxu0 0.0
    %92 = vmatprep.subr.mxu0 0.0
    %93 = vmatpush1.msra.mxu0 0.0
    %94 = vmatprep.subr.mxu0 0.0
    %95 = vmatpush1.msra.mxu0 0.0
    %96 = vmatprep.subr.mxu0 0.0
    %97 = vmatpush1.msra.mxu0 0.0
    %98 = vmatprep.subr.mxu0 0.0
    %99 = vmatpush1.msra.mxu0 0.0
    %100 = vmatprep.subr.mxu0 0.0
    %101 = vmatpush1.msra.mxu0 0.0
    %102 = vmatprep.subr.mxu0 0.0
    %103 = vmatpush1.msra.mxu0 0.0
    %104 = vmatprep.subr.mxu0 0.0
    %105 = vmatpush1.msra.mxu0 0.0
    %106 = vmatprep.subr.mxu0 0.0
    %107 = vmatpush1.msra.mxu0 0.0
    %108 = vmatprep.subr.mxu0 0.0
    %109 = vmatpush1.msra.mxu0 0.0
    %110 = vmatprep.subr.mxu0 0.0
    %111 = vmatpush1.msra.mxu0 0.0
    %112 = vmatprep.subr.mxu0 0.0
    %113 = vmatpush1.msra.mxu0 0.0
    %114 = vmatprep.subr.mxu0 0.0
    %115 = vmatpush1.msra.mxu0 0.0
    %116 = vmatprep.subr.mxu0 0.0
    %117 = vmatpush1.msra.mxu0 0.0
    %118 = vmatprep.subr.mxu0 0.0
    %119 = vmatpush1.msra.mxu0 0.0
    %120 = vmatprep.subr.mxu0 0.0
    %121 = vmatpush1.msra.mxu0 0.0
    %122 = vmatprep.subr.mxu0 0.0
    %123 = vmatpush1.msra.mxu0 0.0
    %124 = vmatprep.subr.mxu0 0.0
    %125 = vmatpush1.msra.mxu0 0.0
    %126 = vmatprep.subr.mxu0 0.0
    %127 = vmatpush1.msra.mxu0 0.0
    %128 = vmatprep.subr.mxu0 0.0
    %129 = vmatpush1.msra.mxu0 0.0
    %130 = vmatprep.mubr.f32.mxu0 0.0
    %131 = vmatmul.mubr.f32.gmra.mrb[0].mxu0 %v64
    %v132 = vpop.f32.mrb[0].mxu0
    %v133 = vadd.f32 0.0, %v132
    %v134 = vpop.f32.mrb[0].mxu0
    %135 = vdwg.mxu0
    %v137 = vsel %vm62, %v58, 0
    %139 = vmatprep.subr.mxu0 0.0
    %140 = vmatpush1.msra.mxu0 %v60
    %141 = vmatprep.subr.mxu0 0.0
    %142 = vmatpush1.msra.mxu0 0.0
    %143 = vmatprep.subr.mxu0 0.0
    %144 = vmatpush1.msra.mxu0 0.0
    %145 = vmatprep.subr.mxu0 0.0
    %146 = vmatpush1.msra.mxu0 0.0
    %147 = vmatprep.subr.mxu0 0.0
    %148 = vmatpush1.msra.mxu0 0.0
    %149 = vmatprep.subr.mxu0 0.0
    %150 = vmatpush1.msra.mxu0 0.0
    %151 = vmatprep.subr.mxu0 0.0
    %152 = vmatpush1.msra.mxu0 0.0
    %153 = vmatprep.subr.mxu0 0.0
    %154 = vmatpush1.msra.mxu0 0.0
    %155 = vmatprep.subr.mxu0 0.0
    %156 = vmatpush1.msra.mxu0 0.0
    %157 = vmatprep.subr.mxu0 0.0
    %158 = vmatpush1.msra.mxu0 0.0
    %159 = vmatprep.subr.mxu0 0.0
    %160 = vmatpush1.msra.mxu0 0.0
    %161 = vmatprep.subr.mxu0 0.0
    %162 = vmatpush1.msra.mxu0 0.0
    %163 = vmatprep.subr.mxu0 0.0
    %164 = vmatpush1.msra.mxu0 0.0
    %165 = vmatprep.subr.mxu0 0.0
    %166 = vmatpush1.msra.mxu0 0.0
    %167 = vmatprep.subr.mxu0 0.0
    %168 = vmatpush1.msra.mxu0 0.0
    %169 = vmatprep.subr.mxu0 0.0
    %170 = vmatpush1.msra.mxu0 0.0
    %171 = vmatprep.subr.mxu0 0.0
    %172 = vmatpush1.msra.mxu0 0.0
    %173 = vmatprep.subr.mxu0 0.0
    %174 = vmatpush1.msra.mxu0 0.0
    %175 = vmatprep.subr.mxu0 0.0
    %176 = vmatpush1.msra.mxu0 0.0
    %177 = vmatprep.subr.mxu0 0.0
    %178 = vmatpush1.msra.mxu0 0.0
    %179 = vmatprep.subr.mxu0 0.0
    %180 = vmatpush1.msra.mxu0 0.0
    %181 = vmatprep.subr.mxu0 0.0
    %182 = vmatpush1.msra.mxu0 0.0
    %183 = vmatprep.subr.mxu0 0.0
    %184 = vmatpush1.msra.mxu0 0.0
    %185 = vmatprep.subr.mxu0 0.0
    %186 = vmatpush1.msra.mxu0 0.0
    %187 = vmatprep.subr.mxu0 0.0
    %188 = vmatpush1.msra.mxu0 0.0
    %189 = vmatprep.subr.mxu0 0.0
    %190 = vmatpush1.msra.mxu0 0.0
    %191 = vmatprep.subr.mxu0 0.0
    %192 = vmatpush1.msra.mxu0 0.0
    %193 = vmatprep.subr.mxu0 0.0
    %194 = vmatpush1.msra.mxu0 0.0
    %195 = vmatprep.subr.mxu0 0.0
    %196 = vmatpush1.msra.mxu0 0.0
    %197 = vmatprep.subr.mxu0 0.0
    %198 = vmatpush1.msra.mxu0 0.0
    %199 = vmatprep.subr.mxu0 0.0
    %200 = vmatpush1.msra.mxu0 0.0
    %201 = vmatprep.subr.mxu0 0.0
    %202 = vmatpush1.msra.mxu0 0.0
    %203 = vmatprep.mubr.f32.mxu0 0.0
    %204 = vmatmul.mubr.f32.gmra.mrb[0].mxu0 %v137
    %v205 = vpop.f32.mrb[0].mxu0
    %v206 = vadd.f32 %v133, %v205
    %v207 = vpop.f32.mrb[0].mxu0
    %208 = vdwg.mxu0
    %v209 = vld [vmem:[%s3] sm:$0x1]
    %v211 = vlaneseq
    %v212 = vshrl.u32 %v211, 7
    %v213 = vsub.s32 0, %v212
    %v214 = vrot.slane %v209, %v213
    %v216 = vadd.f32 %v206, %v214
    %v217 = vmul.f32 %v216, 0.5
    %v218 = vmul.f32 %v216, 0.70710677
    %v219 = verf.f32.pop %v218
    %v220 = vadd.f32 %v219, 1.0
    %v221 = vmul.f32 %v217, %v220
    %v222 = vld [vmem:[%s4] sm:$0xff]
    %v223 = vld [vmem:[%s4 + $0x8] sm:$0xff]
    %v224 = vld [vmem:[%s4 + $0x10] sm:$0xff]
    %v225 = vld [vmem:[%s4 + $0x18] sm:$0xff]
    %v226 = vld [vmem:[%s4 + $0x20] sm:$0xff]
    %v227 = vld [vmem:[%s4 + $0x28] sm:$0xff]
    %v228 = vld [vmem:[%s4 + $0x30] sm:$0xff]
    %v229 = vld [vmem:[%s4 + $0x38] sm:$0xff]
    %v230 = vld [vmem:[%s4 + $0x40] sm:$0xff]
    %v231 = vld [vmem:[%s4 + $0x48] sm:$0xff]
    %v232 = vld [vmem:[%s4 + $0x50] sm:$0xff]
    %v233 = vld [vmem:[%s4 + $0x58] sm:$0xff]
    %v234 = vld [vmem:[%s4 + $0x60] sm:$0xff]
    %v235 = vld [vmem:[%s4 + $0x68] sm:$0xff]
    %v236 = vld [vmem:[%s4 + $0x70] sm:$0xff]
    %v237 = vld [vmem:[%s4 + $0x78] sm:$0xff]
    %v238 = vld [vmem:[%s5] sm:$0x1]
    %v240 = vlaneseq
    %v241 = vshrl.u32 %v240, 7
    %v242 = vsub.s32 0, %v241
    %v243 = vrot.slane %v238, %v242
    %245 = vmatprep.subr.mxu0 0.0
    %246 = vmatpush1.msra.mxu0 %v222
    %247 = vmatprep.subr.mxu0 0.0
    %248 = vmatpush1.msra.mxu0 %v223
    %249 = vmatprep.subr.mxu0 0.0
    %250 = vmatpush1.msra.mxu0 %v224
    %251 = vmatprep.subr.mxu0 0.0
    %252 = vmatpush1.msra.mxu0 %v225
    %253 = vmatprep.subr.mxu0 0.0
    %254 = vmatpush1.msra.mxu0 %v226
    %255 = vmatprep.subr.mxu0 0.0
    %256 = vmatpush1.msra.mxu0 %v227
    %257 = vmatprep.subr.mxu0 0.0
    %258 = vmatpush1.msra.mxu0 %v228
    %259 = vmatprep.subr.mxu0 0.0
    %260 = vmatpush1.msra.mxu0 %v229
    %261 = vmatprep.subr.mxu0 0.0
    %262 = vmatpush1.msra.mxu0 %v230
    %263 = vmatprep.subr.mxu0 0.0
    %264 = vmatpush1.msra.mxu0 %v231
    %265 = vmatprep.subr.mxu0 0.0
    %266 = vmatpush1.msra.mxu0 %v232
    %267 = vmatprep.subr.mxu0 0.0
    %268 = vmatpush1.msra.mxu0 %v233
    %269 = vmatprep.subr.mxu0 0.0
    %270 = vmatpush1.msra.mxu0 %v234
    %271 = vmatprep.subr.mxu0 0.0
    %272 = vmatpush1.msra.mxu0 %v235
    %273 = vmatprep.subr.mxu0 0.0
    %274 = vmatpush1.msra.mxu0 %v236
    %275 = vmatprep.subr.mxu0 0.0
    %276 = vmatpush1.msra.mxu0 %v237
    %277 = vmatprep.subr.mxu0 0.0
    %278 = vmatpush1.msra.mxu0 0.0
    %279 = vmatprep.subr.mxu0 0.0
    %280 = vmatpush1.msra.mxu0 0.0
    %281 = vmatprep.subr.mxu0 0.0
    %282 = vmatpush1.msra.mxu0 0.0
    %283 = vmatprep.subr.mxu0 0.0
    %284 = vmatpush1.msra.mxu0 0.0
    %285 = vmatprep.subr.mxu0 0.0
    %286 = vmatpush1.msra.mxu0 0.0
    %287 = vmatprep.subr.mxu0 0.0
    %288 = vmatpush1.msra.mxu0 0.0
    %289 = vmatprep.subr.mxu0 0.0
    %290 = vmatpush1.msra.mxu0 0.0
    %291 = vmatprep.subr.mxu0 0.0
    %292 = vmatpush1.msra.mxu0 0.0
    %293 = vmatprep.subr.mxu0 0.0
    %294 = vmatpush1.msra.mxu0 0.0
    %295 = vmatprep.subr.mxu0 0.0
    %296 = vmatpush1.msra.mxu0 0.0
    %297 = vmatprep.subr.mxu0 0.0
    %298 = vmatpush1.msra.mxu0 0.0
    %299 = vmatprep.subr.mxu0 0.0
    %300 = vmatpush1.msra.mxu0 0.0
    %301 = vmatprep.subr.mxu0 0.0
    %302 = vmatpush1.msra.mxu0 0.0
    %303 = vmatprep.subr.mxu0 0.0
    %304 = vmatpush1.msra.mxu0 0.0
    %305 = vmatprep.subr.mxu0 0.0
    %306 = vmatpush1.msra.mxu0 0.0
    %307 = vmatprep.subr.mxu0 0.0
    %308 = vmatpush1.msra.mxu0 0.0
    %309 = vmatprep.mubr.f32.mxu0 0.0
    %310 = vmatmul.mubr.f32.gmra.mrb[0].mxu0 %v221
    %v311 = vpop.f32.mrb[0].mxu0
    %v312 = vadd.f32 %v243, %v311
    %v313 = vpop.f32.mrb[0].mxu0
    %314 = vdwg.mxu0
    %v315 = vmul.f32 %v312, 0.5
    %v316 = vmul.f32 %v312, 0.70710677
    %v317 = verf.f32.pop %v316
    %v318 = vadd.f32 %v317, 1.0
    %v319 = vmul.f32 %v315, %v318
    %v320 = vld [vmem:[%s6] sm:$0xff]
    %v321 = vld [vmem:[%s6 + $0x8] sm:$0xff]
    %v322 = vld [vmem:[%s6 + $0x10] sm:$0xff]
    %v323 = vld [vmem:[%s6 + $0x18] sm:$0xff]
    %v324 = vld [vmem:[%s6 + $0x20] sm:$0xff]
    %v325 = vld [vmem:[%s6 + $0x28] sm:$0xff]
    %v326 = vld [vmem:[%s6 + $0x30] sm:$0xff]
    %v327 = vld [vmem:[%s6 + $0x38] sm:$0xff]
    %v328 = vld [vmem:[%s6 + $0x40] sm:$0xff]
    %v329 = vld [vmem:[%s6 + $0x48] sm:$0xff]
    %v330 = vld [vmem:[%s6 + $0x50] sm:$0xff]
    %v331 = vld [vmem:[%s6 + $0x58] sm:$0xff]
    %v332 = vld [vmem:[%s6 + $0x60] sm:$0xff]
    %v333 = vld [vmem:[%s6 + $0x68] sm:$0xff]
    %v334 = vld [vmem:[%s6 + $0x70] sm:$0xff]
    %v335 = vld [vmem:[%s6 + $0x78] sm:$0xff]
    %v336 = vld [vmem:[%s7] sm:$0x1]
    %v338 = vlaneseq
    %v339 = vshrl.u32 %v338, 7
    %v340 = vsub.s32 0, %v339
    %v341 = vrot.slane %v336, %v340
    %343 = vmatprep.subr.mxu0 0.0
    %344 = vmatpush1.msra.mxu0 %v320
    %345 = vmatprep.subr.mxu0 0.0
    %346 = vmatpush1.msra.mxu0 %v321
    %347 = vmatprep.subr.mxu0 0.0
    %348 = vmatpush1.msra.mxu0 %v322
    %349 = vmatprep.subr.mxu0 0.0
    %350 = vmatpush1.msra.mxu0 %v323
    %351 = vmatprep.subr.mxu0 0.0
    %352 = vmatpush1.msra.mxu0 %v324
    %353 = vmatprep.subr.mxu0 0.0
    %354 = vmatpush1.msra.mxu0 %v325
    %355 = vmatprep.subr.mxu0 0.0
    %356 = vmatpush1.msra.mxu0 %v326
    %357 = vmatprep.subr.mxu0 0.0
    %358 = vmatpush1.msra.mxu0 %v327
    %359 = vmatprep.subr.mxu0 0.0
    %360 = vmatpush1.msra.mxu0 %v328
    %361 = vmatprep.subr.mxu0 0.0
    %362 = vmatpush1.msra.mxu0 %v329
    %363 = vmatprep.subr.mxu0 0.0
    %364 = vmatpush1.msra.mxu0 %v330
    %365 = vmatprep.subr.mxu0 0.0
    %366 = vmatpush1.msra.mxu0 %v331
    %367 = vmatprep.subr.mxu0 0.0
    %368 = vmatpush1.msra.mxu0 %v332
    %369 = vmatprep.subr.mxu0 0.0
    %370 = vmatpush1.msra.mxu0 %v333
    %371 = vmatprep.subr.mxu0 0.0
    %372 = vmatpush1.msra.mxu0 %v334
    %373 = vmatprep.subr.mxu0 0.0
    %374 = vmatpush1.msra.mxu0 %v335
    %375 = vmatprep.subr.mxu0 0.0
    %376 = vmatpush1.msra.mxu0 0.0
    %377 = vmatprep.subr.mxu0 0.0
    %378 = vmatpush1.msra.mxu0 0.0
    %379 = vmatprep.subr.mxu0 0.0
    %380 = vmatpush1.msra.mxu0 0.0
    %381 = vmatprep.subr.mxu0 0.0
    %382 = vmatpush1.msra.mxu0 0.0
    %383 = vmatprep.subr.mxu0 0.0
    %384 = vmatpush1.msra.mxu0 0.0
    %385 = vmatprep.subr.mxu0 0.0
    %386 = vmatpush1.msra.mxu0 0.0
    %387 = vmatprep.subr.mxu0 0.0
    %388 = vmatpush1.msra.mxu0 0.0
    %389 = vmatprep.subr.mxu0 0.0
    %390 = vmatpush1.msra.mxu0 0.0
    %391 = vmatprep.subr.mxu0 0.0
    %392 = vmatpush1.msra.mxu0 0.0
    %393 = vmatprep.subr.mxu0 0.0
    %394 = vmatpush1.msra.mxu0 0.0
    %395 = vmatprep.subr.mxu0 0.0
    %396 = vmatpush1.msra.mxu0 0.0
    %397 = vmatprep.subr.mxu0 0.0
    %398 = vmatpush1.msra.mxu0 0.0
    %399 = vmatprep.subr.mxu0 0.0
    %400 = vmatpush1.msra.mxu0 0.0
    %401 = vmatprep.subr.mxu0 0.0
    %402 = vmatpush1.msra.mxu0 0.0
    %403 = vmatprep.subr.mxu0 0.0
    %404 = vmatpush1.msra.mxu0 0.0
    %405 = vmatprep.subr.mxu0 0.0
    %406 = vmatpush1.msra.mxu0 0.0
    %407 = vmatprep.mubr.f32.mxu0 0.0
    %408 = vmatmul.mubr.f32.gmra.mrb[0].mxu0 %v319
    %v409 = vpop.f32.mrb[0].mxu0
    %v410 = vadd.f32 %v341, %v409
    %v411 = vpop.f32.mrb[0].mxu0
    %412 = vdwg.mxu0
    %413 = vst.msk [vmem:[#allocation7] sm:$0xff] %vm62, %v410
    // Predicated region
    $region42: #{tpu_custom_call.1} parent=1 // pred_check
      _
    $region43: #{tpu_custom_call.1} parent=1 // pred_check_branch
      %415 = sbr.rel (0) target = $region45
    $region44: #{tpu_custom_call.1} parent=1 // pred_region
      %s417 = ssub.s32 128, 64
      %418 = vsyncadd [#allocation4], %s417
      %s419 = sshll.u32 [#allocation7], 4
      %s420 = int_to_ptr.vmem [resolvable:$true] %s419
      %425 = dma.vmem_to_hbm [thread:$0]  %s420, 64, %s8, [#allocation4], 64, 64, 4
    $region45: #{tpu_custom_call.1} parent=1 // pred_fallthru
      _
    // Predicated region
    $region46: #{tpu_custom_call.1} parent=1 // pred_check
      _
    $region47: #{tpu_custom_call.1} parent=1 // pred_check_branch
      %427 = sbr.rel (0) target = $region49
    $region48: #{tpu_custom_call.1} parent=1 // pred_region
      %428 = dma.done [#allocation4], 128
    $region49: #{tpu_custom_call.1} parent=1 // pred_fallthru
      _
    %429 = vsyncpa [#allocation3], 1
    %430 = vsyncpa [#allocation6], 1
    %431 = vsyncpa [#allocation4], 1

</llo_original>
